<compile_context>
chip_gen: v6e
topology: v6e:2x2x1
jax: 0.10.0
libtpu: 0.0.40
codegen_flags: <defaults>
</compile_context>

<pallas_src>
import math
import jax
import jax.numpy as jnp
from jax import lax
from jax.experimental import pallas as pl
from jax.experimental.pallas import tpu as pltpu

HIDDEN = 256


def critic_kernel(xa_ref, w1_ref, b1_ref, w2_ref, b2_ref, w3_ref, b3_ref, o_ref):
    # Layer 1: h1 = relu(xa @ W1 + b1); xa is the lane-packed, zero-padded [x|a] bf16 tile.
    h1 = jnp.dot(xa_ref[...], w1_ref[...],
                 preferred_element_type=jnp.float32) + b1_ref[...]
    h1 = jnp.maximum(h1, 0.0).astype(jnp.bfloat16)
    # Layer 2: h2 = relu(h1 @ W2 + b2)
    h2 = jnp.dot(h1, w2_ref[...],
                 preferred_element_type=jnp.float32) + b2_ref[...]
    h2 = jnp.maximum(h2, 0.0).astype(jnp.bfloat16)
    # Layer 3 (256 -> 1) as a single M=1 MXU matmul contracting the 256 axis of both
    # operands, producing the (1, TB) lane-dense output row directly.
    q = lax.dot_general(w3_ref[...], h2,
                        dimension_numbers=(((1,), (1,)), ((), ())),
                        preferred_element_type=jnp.float32)          # (1, TB)
    o_ref[...] = (q + b3_ref[0]).astype(o_ref.dtype)


def _tile_and_pad(batch):
    """Return (batch tile, padded batch).

    - Lane-dense: tiles are multiples of 128 rows so the (1, TB) output block is an
      unmasked full-lane store and the MXU M dimension is filled on v5e as well.
    - Overhead amortization: per-grid-step cost (~0.35 us) dwarfs per-tile compute for
      this tiny MLP, so the whole padded batch is taken in as few steps as possible.
    - v7x: keep >= 2 grid steps whenever batch > 128 so the "parallel" batch axis can be
      sharded across its two TensorCores (v5e/v6e are indifferent).
    """
    if batch <= 128:
        return 128, 128                                  # one lane-dense step
    if batch <= 4096:
        b_pad = -(-batch // 256) * 256                   # multiple of 256 -> 2 equal tiles
        return b_pad // 2, b_pad
    tb = 2048
    b_pad = -(-batch // tb) * tb
    if b_pad - batch > 1024:                             # bound padding waste
        tb = 1024
        b_pad = -(-batch // tb) * tb
    return tb, b_pad


def critic_forward(x, a, params):
    """x: (B, obs_dim) f32, a: (B, act_dim) f32 -> (B, 1) f32 Q-values."""
    assert x.shape[0] == a.shape[0]
    assert x.ndim == 2 and a.ndim == 2
    w1, b1, w2, b2, w3row, b3 = params
    obs_dim, act_dim = x.shape[1], a.shape[1]
    in_dim = obs_dim + act_dim
    hidden = w2.shape[0]
    assert w1.shape == (in_dim, hidden)

    # Lane-packed layer-1 input width (zero-padded to a full 128-lane vreg row).
    k_pad = max(128, -(-in_dim // 128) * 128)

    # Pack [x|a], zero-pad the feature axis, cast to bf16 in the wrapper (outside the
    # kernel) so the streamed activation traffic and input VMEM tiles are half-width.
    xa = jnp.concatenate([x, a], axis=1)
    xa = jnp.pad(xa, ((0, 0), (0, k_pad - in_dim))).astype(jnp.bfloat16)

    # bf16 weights on the MXU, f32 accumulation.  W1 zero-padded on its input dim to
    # match the packed input.  (In a training loop hoist these pads/casts out of the
    # per-step path; they total ~300 KB so they are cheap either way.)
    w1_k = jnp.pad(w1, ((0, k_pad - in_dim), (0, 0))).astype(jnp.bfloat16)
    w2_k = w2.astype(jnp.bfloat16)
    w3_k = w3row.astype(jnp.bfloat16)

    batch = x.shape[0]
    tb, b_pad = _tile_and_pad(batch)
    if b_pad != batch:
        xa = jnp.pad(xa, ((0, b_pad - batch), (0, 0)))

    q_row = pl.pallas_call(
        critic_kernel,
        out_shape=jax.ShapeDtypeStruct((1, b_pad), jnp.float32),
        grid=(b_pad // tb,),
        in_specs=[
            pl.BlockSpec((tb, k_pad), lambda i: (i, 0)),          # packed [x|a] tile (streamed)
            pl.BlockSpec((k_pad, hidden), lambda i: (0, 0)),      # W1 (VMEM-resident)
            pl.BlockSpec((1, hidden), lambda i: (0, 0)),          # b1  (resident)
            pl.BlockSpec((hidden, hidden), lambda i: (0, 0)),     # W2  (resident)
            pl.BlockSpec((1, hidden), lambda i: (0, 0)),          # b2  (resident)
            pl.BlockSpec((1, hidden), lambda i: (0, 0)),          # W3 row (resident)
            pl.BlockSpec(memory_space=pltpu.MemorySpace.SMEM),    # b3 scalar
        ],
        out_specs=pl.BlockSpec((1, tb), lambda i: (0, i)),
        compiler_params=pltpu.CompilerParams(
            dimension_semantics=("parallel",)),
    )(xa, w1_k, b1, w2_k, b2, w3_k, b3)
    # Padded rows are computed on zero inputs and sliced off here; nothing downstream
    # ever sees them.
    return q_row[0, :batch][:, None]


def init_critic_params(key, obs_dim, act_dim, hidden=HIDDEN):
    """kaiming_uniform_(nonlinearity='relu') weights + zero biases (matches weights_init_).

    Weights are stored as (in, out) = transpose of nn.Linear.weight; W1 covers the full
    concatenated (obs+act) input so the module's torch.cat semantics are preserved.
    """
    def kaiming_uniform(k, fan_in, shape):
        bound = math.sqrt(2.0) * math.sqrt(3.0 / fan_in)
        return jax.random.uniform(k, shape, jnp.float32, -bound, bound)

    k1, k2, k3 = jax.random.split(key, 3)
    fan_in1 = obs_dim + act_dim
    w1 = kaiming_uniform(k1, fan_in1, (fan_in1, hidden))
    b1 = jnp.zeros((1, hidden), jnp.float32)
    w2 = kaiming_uniform(k2, hidden, (hidden, hidden))
    b2 = jnp.zeros((1, hidden), jnp.float32)
    w3row = kaiming_uniform(k3, hidden, (1, hidden))   # (256 -> 1) weight stored as a row
    b3 = jnp.zeros((1,), jnp.float32)
    return (w1, b1, w2, b2, w3row, b3)


def critic_ref_f32(x, a, params):
    """Original-module (all-f32) semantics."""
    w1, b1, w2, b2, w3row, b3 = params
    xa = jnp.concatenate([x, a], axis=1)
    h = jnp.maximum(xa @ w1 + b1, 0.0)
    h = jnp.maximum(h @ w2 + b2, 0.0)
    return h @ w3row.T + b3[0]


def critic_ref_bf16(x, a, params):
    """Mirror of the kernel's bf16-weight/activation, f32-accumulate math (tight check)."""
    w1, b1, w2, b2, w3row, b3 = params
    xa = jnp.concatenate([x, a], axis=1).astype(jnp.bfloat16)
    h1 = jnp.dot(xa, w1.astype(jnp.bfloat16), preferred_element_type=jnp.float32) + b1
    h1 = jnp.maximum(h1, 0.0).astype(jnp.bfloat16)
    h2 = jnp.dot(h1, w2.astype(jnp.bfloat16), preferred_element_type=jnp.float32) + b2
    h2 = jnp.maximum(h2, 0.0).astype(jnp.bfloat16)
    q = jnp.dot(h2, w3row.astype(jnp.bfloat16).T, preferred_element_type=jnp.float32)
    return q + b3[0]


if __name__ == "__main__":
    key = jax.random.PRNGKey(0)
    k_x, k_a, k_p = jax.random.split(key, 3)

    batch, obs_dim, act_dim = 8, 16, 8  # small shapes consistent with a continuous-control env
    x = jax.random.normal(k_x, (batch, obs_dim), jnp.float32)
    a = jax.random.normal(k_a, (batch, act_dim), jnp.float32)
    params = init_critic_params(k_p, obs_dim, act_dim, hidden=HIDDEN)

    q = jax.block_until_ready(critic_forward(x, a, params))
    assert q.shape == (batch, 1)

    q_bf16 = jax.block_until_ready(critic_ref_bf16(x, a, params))
    q_f32 = jax.block_until_ready(critic_ref_f32(x, a, params))
    # Tight check against the exact bf16-weight/f32-accumulate mirror of the kernel.
    assert jnp.allclose(q, q_bf16, atol=1e-2, rtol=1e-2), (q, q_bf16)
    # Looser check vs. the original all-f32 module (deliberate bf16 weight/activation
    # quantization; validate end-to-end in training if TD-target quality matters).
    assert jnp.allclose(q, q_f32, atol=1e-1, rtol=1e-1), (q, q_f32)
    print("KERNEL_OK")
</pallas_src>

<mosaic_0001>
module attributes {stable_mosaic.version = 11 : i64} {
  func.func @critic_kernel(%arg0: i32, %arg1: memref<128x128xbf16, #tpu.memory_space<vmem>>, %arg2: memref<128x256xbf16, #tpu.memory_space<vmem>>, %arg3: memref<1x256xf32, #tpu.memory_space<vmem>>, %arg4: memref<256x256xbf16, #tpu.memory_space<vmem>>, %arg5: memref<1x256xf32, #tpu.memory_space<vmem>>, %arg6: memref<1x256xbf16, #tpu.memory_space<vmem>>, %arg7: memref<1xf32, #tpu.memory_space<smem>>, %arg8: memref<1x128xf32, #tpu.memory_space<vmem>>) attributes {dimension_semantics = [#tpu.dimension_semantics<parallel>], iteration_bounds = array<i64: 1>, scalar_prefetch = 0 : i64, scratch_operands = 0 : i64, tpu.core_type = #tpu.core_type<tc>, window_params = [{transform_indices = @transform_0, window_bounds = array<i64: 128, 128>}, {pipeline_mode = #tpu.pipeline_mode<synchronous>, transform_indices = @transform_1, window_bounds = array<i64: 128, 256>}, {pipeline_mode = #tpu.pipeline_mode<synchronous>, transform_indices = @transform_2, window_bounds = array<i64: 1, 256>}, {pipeline_mode = #tpu.pipeline_mode<synchronous>, transform_indices = @transform_3, window_bounds = array<i64: 256, 256>}, {pipeline_mode = #tpu.pipeline_mode<synchronous>, transform_indices = @transform_4, window_bounds = array<i64: 1, 256>}, {pipeline_mode = #tpu.pipeline_mode<synchronous>, transform_indices = @transform_5, window_bounds = array<i64: 1, 256>}, {transform_indices = @transform_6, window_bounds = array<i64: 1>}, {transform_indices = @transform_7, window_bounds = array<i64: 1, 128>}]} {
    %c0 = arith.constant 0 : index
    %c0_0 = arith.constant 0 : index
    %0 = vector.load %arg1[%c0, %c0_0] : memref<128x128xbf16, #tpu.memory_space<vmem>>, vector<128x128xbf16>
    %c0_1 = arith.constant 0 : index
    %c0_2 = arith.constant 0 : index
    %1 = vector.load %arg2[%c0_1, %c0_2] : memref<128x256xbf16, #tpu.memory_space<vmem>>, vector<128x256xbf16>
    %cst = arith.constant dense<0.000000e+00> : vector<128x256xf32>
    %2 = tpu.matmul %0, %1, %cst {dimension_numbers = #tpu.dot_dimension_numbers<[1], [0], [0], [1], [0, 0, 1, 1], [], []>} : vector<128x128xbf16>, vector<128x256xbf16>, vector<128x256xf32> -> vector<128x256xf32>
    %c0_3 = arith.constant 0 : index
    %c0_4 = arith.constant 0 : index
    %3 = vector.load %arg3[%c0_3, %c0_4] : memref<1x256xf32, #tpu.memory_space<vmem>>, vector<1x256xf32>
    %4 = vector.broadcast %3 : vector<1x256xf32> to vector<128x256xf32>
    %5 = arith.addf %2, %4 : vector<128x256xf32>
    %cst_5 = arith.constant 0.000000e+00 : f32
    %6 = vector.broadcast %cst_5 : f32 to vector<128x256xf32>
    %7 = arith.maximumf %5, %6 : vector<128x256xf32>
    %8 = arith.truncf %7 : vector<128x256xf32> to vector<128x256xbf16>
    %c0_6 = arith.constant 0 : index
    %c0_7 = arith.constant 0 : index
    %9 = vector.load %arg4[%c0_6, %c0_7] : memref<256x256xbf16, #tpu.memory_space<vmem>>, vector<256x256xbf16>
    %cst_8 = arith.constant dense<0.000000e+00> : vector<128x256xf32>
    %10 = tpu.matmul %8, %9, %cst_8 {dimension_numbers = #tpu.dot_dimension_numbers<[1], [0], [0], [1], [0, 0, 1, 1], [], []>} : vector<128x256xbf16>, vector<256x256xbf16>, vector<128x256xf32> -> vector<128x256xf32>
    %c0_9 = arith.constant 0 : index
    %c0_10 = arith.constant 0 : index
    %11 = vector.load %arg5[%c0_9, %c0_10] : memref<1x256xf32, #tpu.memory_space<vmem>>, vector<1x256xf32>
    %12 = vector.broadcast %11 : vector<1x256xf32> to vector<128x256xf32>
    %13 = arith.addf %10, %12 : vector<128x256xf32>
    %cst_11 = arith.constant 0.000000e+00 : f32
    %14 = vector.broadcast %cst_11 : f32 to vector<128x256xf32>
    %15 = arith.maximumf %13, %14 : vector<128x256xf32>
    %16 = arith.truncf %15 : vector<128x256xf32> to vector<128x256xbf16>
    %c0_12 = arith.constant 0 : index
    %c0_13 = arith.constant 0 : index
    %17 = vector.load %arg6[%c0_12, %c0_13] : memref<1x256xbf16, #tpu.memory_space<vmem>>, vector<1x256xbf16>
    %cst_14 = arith.constant dense<0.000000e+00> : vector<1x128xf32>
    %18 = tpu.matmul %17, %16, %cst_14 {dimension_numbers = #tpu.dot_dimension_numbers<[1], [1], [0], [0], [0, 0, 1, 0], [], []>} : vector<1x256xbf16>, vector<128x256xbf16>, vector<1x128xf32> -> vector<1x128xf32>
    %c0_15 = arith.constant 0 : index
    %19 = memref.load %arg7[%c0_15] : memref<1xf32, #tpu.memory_space<smem>>
    %20 = vector.broadcast %19 : f32 to vector<1x128xf32>
    %21 = arith.addf %18, %20 : vector<1x128xf32>
    %c0_16 = arith.constant 0 : index
    %c0_17 = arith.constant 0 : index
    %22 = vector.load %arg8[%c0_16, %c0_17] : memref<1x128xf32, #tpu.memory_space<vmem>>, vector<1x128xf32>
    tpu.vector_store %arg8[%c0_16, %c0_17], %21 {strides = array<i32>} : memref<1x128xf32, #tpu.memory_space<vmem>>, vector<1x128xf32>,
    return
  }
  func.func @transform_0(%arg0: i32) -> (i32, i32) {
    %c0_i32 = arith.constant 0 : i32
    %c0_i32_0 = arith.constant 0 : i32
    return %arg0, %c0_i32 : i32, i32
  }
  func.func @transform_1(%arg0: i32) -> (i32, i32) {
    %c0_i32 = arith.constant 0 : i32
    %c0_i32_0 = arith.constant 0 : i32
    %c0_i32_1 = arith.constant 0 : i32
    return %c0_i32, %c0_i32_0 : i32, i32
  }
  func.func @transform_2(%arg0: i32) -> (i32, i32) {
    %c0_i32 = arith.constant 0 : i32
    %c0_i32_0 = arith.constant 0 : i32
    %c0_i32_1 = arith.constant 0 : i32
    return %c0_i32, %c0_i32_0 : i32, i32
  }
  func.func @transform_3(%arg0: i32) -> (i32, i32) {
    %c0_i32 = arith.constant 0 : i32
    %c0_i32_0 = arith.constant 0 : i32
    %c0_i32_1 = arith.constant 0 : i32
    return %c0_i32, %c0_i32_0 : i32, i32
  }
  func.func @transform_4(%arg0: i32) -> (i32, i32) {
    %c0_i32 = arith.constant 0 : i32
    %c0_i32_0 = arith.constant 0 : i32
    %c0_i32_1 = arith.constant 0 : i32
    return %c0_i32, %c0_i32_0 : i32, i32
  }
  func.func @transform_5(%arg0: i32) -> (i32, i32) {
    %c0_i32 = arith.constant 0 : i32
    %c0_i32_0 = arith.constant 0 : i32
    %c0_i32_1 = arith.constant 0 : i32
    return %c0_i32, %c0_i32_0 : i32, i32
  }
  func.func @transform_6(%arg0: i32) -> i32 {
    %c0_i32 = arith.constant 0 : i32
    %c0_i32_0 = arith.constant 0 : i32
    return %c0_i32 : i32
  }
  func.func @transform_7(%arg0: i32) -> (i32, i32) {
    %c0_i32 = arith.constant 0 : i32
    %c0_i32_0 = arith.constant 0 : i32
    return %c0_i32, %arg0 : i32, i32
  }
}

</mosaic_0001>

<llo_original>
// kernel: tpu_custom_call.1
$region0: #{tpu_custom_call.1}
  #allocation0 [shape = 'u32[]', space=smem, size = 0x4, offset = 0x4, fixed_abs, tag = 'smem constant byte address 0x4 - core index']
  #allocation1 [shape = 'u32[144,128]{1,0:T(1,128)}', space=vmem, size = 0x12000, scoped, tag = 'internal scratch']
  #allocation2 [shape = 'f32[1]{0:T(128)S(6)}', space=smem, size = 0x200, scoped, tag = 'scoped memory for tpu_custom_call.1']
  %s0 = inlined_call_operand.hbm [shape: bf16[128,128], index: 0, kind: input, shape index: {}]
  %s1 = inlined_call_operand.hbm [shape: bf16[128,256], index: 1, kind: input, shape index: {}]
  %s2 = inlined_call_operand.vmem [shape: f32[1,256], index: 2, kind: input, shape index: {}]
  %s3 = inlined_call_operand.hbm [shape: bf16[256,256], index: 3, kind: input, shape index: {}]
  %s4 = inlined_call_operand.vmem [shape: f32[1,256], index: 4, kind: input, shape index: {}]
  %s5 = inlined_call_operand.vmem [shape: bf16[1,256], index: 5, kind: input, shape index: {}]
  %s6 = inlined_call_operand.<no memory space> [shape: f32[1], index: 6, kind: input, shape index: {}]
  %s7 = inlined_call_operand.hbm [shape: f32[1,128], index: 7, kind: output, shape index: {}]
  %s8 = sld [smem:[#allocation0]]
  $region50: #{tpu_custom_call.1} parent=0
    _
  %s10 = ssub.s32 1, %s8
  %s11 = scalar_select 0, %s10, %s8
  %12 = sst [smem:[#allocation2]] %s6
  $region1: #{tpu_custom_call.1} parent=0
    #allocation3 [shape = 'u8[32768]{0}', space=vmem, size = 0x8000, scoped, tag = 'input window, operand 0, single buffered']
    #allocation4 [shape = 's32[1]{0}', space=sflag, size = 0x4, scoped, tag = 'scoped memory for tpu_custom_call.1']
    #allocation5 [shape = 's32[1]{0}', space=sflag, size = 0x4, scoped, tag = 'scoped memory for tpu_custom_call.1']
    #allocation6 [shape = 'u8[65536]{0}', space=vmem, size = 0x10000, scoped, tag = 'input window, operand 1, single buffered']
    #allocation7 [shape = 's32[1]{0}', space=sflag, size = 0x4, scoped, tag = 'scoped memory for tpu_custom_call.1']
    #allocation8 [shape = 'u8[131072]{0}', space=vmem, size = 0x20000, scoped, tag = 'input window, operand 3, single buffered']
    #allocation9 [shape = 'u8[512]{0}', space=vmem, size = 0x400, scoped, tag = 'output window, operand 0, single buffered']
    %13 = vsyncpa [#allocation4], 0
    %14 = vsyncpa [#allocation7], 0
    %15 = vsyncpa [#allocation5], 0
    // Predicated region
    $region2: #{tpu_custom_call.1} parent=1 // pred_check
      _
    $region3: #{tpu_custom_call.1} parent=1 // pred_check_branch
      %17 = sbr.rel (0) target = $region5
    $region4: #{tpu_custom_call.1} parent=1 // pred_region
      %s19 = ssub.s32 1024, 1024
      %20 = vsyncadd [#allocation4], %s19
      %s21 = sshll.u32 [#allocation3], 4
      %s22 = int_to_ptr.vmem [resolvable:$true] %s21
      %27 = dma.hbm_to_vmem [thread:$0]  %s0, 1024, %s22, [#allocation4], 64, 64, 4
    $region5: #{tpu_custom_call.1} parent=1 // pred_fallthru
      _
    // Predicated region
    $region6: #{tpu_custom_call.1} parent=1 // pred_check
      _
    $region7: #{tpu_custom_call.1} parent=1 // pred_check_branch
      %29 = sbr.rel (0) target = $region9
    $region8: #{tpu_custom_call.1} parent=1 // pred_region
      %s31 = ssub.s32 2048, 2048
      %32 = vsyncadd [#allocation7], %s31
      %s33 = sshll.u32 [#allocation6], 4
      %s34 = int_to_ptr.vmem [resolvable:$true] %s33
      %39 = dma.hbm_to_vmem [thread:$0]  %s1, 2048, %s34, [#allocation7], 128, 128, 8
    $region9: #{tpu_custom_call.1} parent=1 // pred_fallthru
      _
    // Predicated region
    $region10: #{tpu_custom_call.1} parent=1 // pred_check
      _
    $region11: #{tpu_custom_call.1} parent=1 // pred_check_branch
      %41 = sbr.rel (0) target = $region13
    $region12: #{tpu_custom_call.1} parent=1 // pred_region
      _
    $region13: #{tpu_custom_call.1} parent=1 // pred_fallthru
      _
    // Predicated region
    $region14: #{tpu_custom_call.1} parent=1 // pred_check
      _
    $region15: #{tpu_custom_call.1} parent=1 // pred_check_branch
      %43 = sbr.rel (0) target = $region17
    $region16: #{tpu_custom_call.1} parent=1 // pred_region
      %s45 = ssub.s32 4096, 4096
      %46 = vsyncadd [#allocation7], %s45
      %s47 = sshll.u32 [#allocation8], 4
      %s48 = int_to_ptr.vmem [resolvable:$true] %s47
      %53 = dma.hbm_to_vmem [thread:$0]  %s3, 4096, %s48, [#allocation7], 128, 128, 8
    $region17: #{tpu_custom_call.1} parent=1 // pred_fallthru
      _
    // Predicated region
    $region18: #{tpu_custom_call.1} parent=1 // pred_check
      _
    $region19: #{tpu_custom_call.1} parent=1 // pred_check_branch
      %55 = sbr.rel (0) target = $region21
    $region20: #{tpu_custom_call.1} parent=1 // pred_region
      _
    $region21: #{tpu_custom_call.1} parent=1 // pred_fallthru
      _
    // Predicated region
    $region22: #{tpu_custom_call.1} parent=1 // pred_check
      _
    $region23: #{tpu_custom_call.1} parent=1 // pred_check_branch
      %57 = sbr.rel (0) target = $region25
    $region24: #{tpu_custom_call.1} parent=1 // pred_region
      _
    $region25: #{tpu_custom_call.1} parent=1 // pred_fallthru
      _
    // Predicated region
    $region26: #{tpu_custom_call.1} parent=1 // pred_check
      _
    $region27: #{tpu_custom_call.1} parent=1 // pred_check_branch
      %59 = sbr.rel (0) target = $region29
    $region28: #{tpu_custom_call.1} parent=1 // pred_region
      _
    $region29: #{tpu_custom_call.1} parent=1 // pred_fallthru
      _
    // Predicated region
    $region30: #{tpu_custom_call.1} parent=1 // pred_check
      _
    $region31: #{tpu_custom_call.1} parent=1 // pred_check_branch
      %61 = sbr.rel (0) target = $region33
    $region32: #{tpu_custom_call.1} parent=1 // pred_region
      %62 = dma.done [#allocation4], 1024
    $region33: #{tpu_custom_call.1} parent=1 // pred_fallthru
      _
    // Predicated region
    $region34: #{tpu_custom_call.1} parent=1 // pred_check
      _
    $region35: #{tpu_custom_call.1} parent=1 // pred_check_branch
      %64 = sbr.rel (0) target = $region37
    $region36: #{tpu_custom_call.1} parent=1 // pred_region
      %65 = dma.done [#allocation7], 2048
    $region37: #{tpu_custom_call.1} parent=1 // pred_fallthru
      _
    // Predicated region
    $region38: #{tpu_custom_call.1} parent=1 // pred_check
      _
    $region39: #{tpu_custom_call.1} parent=1 // pred_check_branch
      %67 = sbr.rel (0) target = $region41
    $region40: #{tpu_custom_call.1} parent=1 // pred_region
      %68 = dma.done [#allocation7], 4096
    $region41: #{tpu_custom_call.1} parent=1 // pred_fallthru
      _
    %v70 = vld [vmem:[#allocation3] sm:$0xf]
    %v71 = vld [vmem:[#allocation3 + $0x4] sm:$0xf]
    %v72 = vld [vmem:[#allocation3 + $0x8] sm:$0xf]
    %v73 = vld [vmem:[#allocation3 + $0xc] sm:$0xf]
    %v74 = vld [vmem:[#allocation3 + $0x10] sm:$0xf]
    %v75 = vld [vmem:[#allocation3 + $0x14] sm:$0xf]
    %v76 = vld [vmem:[#allocation3 + $0x18] sm:$0xf]
    %v77 = vld [vmem:[#allocation3 + $0x1c] sm:$0xf]
    %v78 = vld [vmem:[#allocation3 + $0x20] sm:$0xf]
    %v79 = vld [vmem:[#allocation3 + $0x24] sm:$0xf]
    %v80 = vld [vmem:[#allocation3 + $0x28] sm:$0xf]
    %v81 = vld [vmem:[#allocation3 + $0x2c] sm:$0xf]
    %v82 = vld [vmem:[#allocation3 + $0x30] sm:$0xf]
    %v83 = vld [vmem:[#allocation3 + $0x34] sm:$0xf]
    %v84 = vld [vmem:[#allocation3 + $0x38] sm:$0xf]
    %v85 = vld [vmem:[#allocation3 + $0x3c] sm:$0xf]
    %v86 = vld [vmem:[#allocation6] sm:$0xff]
    %v87 = vld [vmem:[#allocation6 + $0x8] sm:$0xff]
    %v88 = vld [vmem:[#allocation6 + $0x10] sm:$0xff]
    %v89 = vld [vmem:[#allocation6 + $0x18] sm:$0xff]
    %v90 = vld [vmem:[#allocation6 + $0x20] sm:$0xff]
    %v91 = vld [vmem:[#allocation6 + $0x28] sm:$0xff]
    %v92 = vld [vmem:[#allocation6 + $0x30] sm:$0xff]
    %v93 = vld [vmem:[#allocation6 + $0x38] sm:$0xff]
    %v94 = vld [vmem:[#allocation6 + $0x40] sm:$0xff]
    %v95 = vld [vmem:[#allocation6 + $0x48] sm:$0xff]
    %v96 = vld [vmem:[#allocation6 + $0x50] sm:$0xff]
    %v97 = vld [vmem:[#allocation6 + $0x58] sm:$0xff]
    %v98 = vld [vmem:[#allocation6 + $0x60] sm:$0xff]
    %v99 = vld [vmem:[#allocation6 + $0x68] sm:$0xff]
    %v100 = vld [vmem:[#allocation6 + $0x70] sm:$0xff]
    %v101 = vld [vmem:[#allocation6 + $0x78] sm:$0xff]
    %v102 = vld [vmem:[%s2] sm:$0x3]
    %v104 = vlaneseq
    %v105 = vshrl.u32 %v104, 7
    %v106 = vsub.s32 0, %v105
    %v107 = vrot.slane %v102, %v106
    %v108 = vlaneseq
    %v109 = vshrl.u32 %v108, 7
    %v110 = vsub.s32 1, %v109
    %v111 = vrot.slane %v102, %v110
    %v130 = vunpack.c.l.b16 %v70
    %v131 = vunpack.c.l.b16 %v71
    %v132 = vunpack.c.l.b16 %v72
    %v133 = vunpack.c.l.b16 %v73
    %v134 = vunpack.c.l.b16 %v74
    %v135 = vunpack.c.l.b16 %v75
    %v136 = vunpack.c.l.b16 %v76
    %v137 = vunpack.c.l.b16 %v77
    %v138 = vunpack.c.l.b16 %v78
    %v139 = vunpack.c.l.b16 %v79
    %v140 = vunpack.c.l.b16 %v80
    %v141 = vunpack.c.l.b16 %v81
    %v142 = vunpack.c.l.b16 %v82
    %v143 = vunpack.c.l.b16 %v83
    %v144 = vunpack.c.l.b16 %v84
    %v145 = vunpack.c.l.b16 %v85
    %v146 = vpack.c.b16 %v131, %v130
    %v147 = vpack.c.b16 %v133, %v132
    %v148 = vpack.c.b16 %v135, %v134
    %v149 = vpack.c.b16 %v137, %v136
    %v150 = vpack.c.b16 %v139, %v138
    %v151 = vpack.c.b16 %v141, %v140
    %v152 = vpack.c.b16 %v143, %v142
    %v153 = vpack.c.b16 %v145, %v144
    %v178 = vunpack.c.l.b16 %v86
    %v179 = vunpack.c.h.b16 %v86
    %v180 = vunpack.c.l.b16 %v87
    %v181 = vunpack.c.h.b16 %v87
    %v182 = vunpack.c.l.b16 %v88
    %v183 = vunpack.c.h.b16 %v88
    %v184 = vunpack.c.l.b16 %v89
    %v185 = vunpack.c.h.b16 %v89
    %v186 = vunpack.c.l.b16 %v90
    %v187 = vunpack.c.h.b16 %v90
    %v188 = vunpack.c.l.b16 %v91
    %v189 = vunpack.c.h.b16 %v91
    %v190 = vunpack.c.l.b16 %v92
    %v191 = vunpack.c.h.b16 %v92
    %v192 = vunpack.c.l.b16 %v93
    %v193 = vunpack.c.h.b16 %v93
    %v194 = vunpack.c.l.b16 %v94
    %v195 = vunpack.c.h.b16 %v94
    %v196 = vunpack.c.l.b16 %v95
    %v197 = vunpack.c.h.b16 %v95
    %v198 = vunpack.c.l.b16 %v96
    %v199 = vunpack.c.h.b16 %v96
    %v200 = vunpack.c.l.b16 %v97
    %v201 = vunpack.c.h.b16 %v97
    %v202 = vunpack.c.l.b16 %v98
    %v203 = vunpack.c.h.b16 %v98
    %v204 = vunpack.c.l.b16 %v99
    %v205 = vunpack.c.h.b16 %v99
    %v206 = vunpack.c.l.b16 %v100
    %v207 = vunpack.c.h.b16 %v100
    %v208 = vunpack.c.l.b16 %v101
    %v209 = vunpack.c.h.b16 %v101
    %v210 = vpack.c.b16 %v180, %v178
    %v211 = vpack.c.b16 %v181, %v179
    %v212 = vpack.c.b16 %v184, %v182
    %v213 = vpack.c.b16 %v185, %v183
    %v214 = vpack.c.b16 %v188, %v186
    %v215 = vpack.c.b16 %v189, %v187
    %v216 = vpack.c.b16 %v192, %v190
    %v217 = vpack.c.b16 %v193, %v191
    %v218 = vpack.c.b16 %v196, %v194
    %v219 = vpack.c.b16 %v197, %v195
    %v220 = vpack.c.b16 %v200, %v198
    %v221 = vpack.c.b16 %v201, %v199
    %v222 = vpack.c.b16 %v204, %v202
    %v223 = vpack.c.b16 %v205, %v203
    %v224 = vpack.c.b16 %v208, %v206
    %v225 = vpack.c.b16 %v209, %v207
    %242 = vmatprep.subr.bf16.mxu0 %v225
    %243 = vmatpush1.bf16.msra.mxu0 %v224
    %244 = vmatprep.subr.bf16.mxu0 %v223
    %245 = vmatpush1.bf16.msra.mxu0 %v222
    %246 = vmatprep.subr.bf16.mxu0 %v221
    %247 = vmatpush1.bf16.msra.mxu0 %v220
    %248 = vmatprep.subr.bf16.mxu0 %v219
    %249 = vmatpush1.bf16.msra.mxu0 %v218
    %250 = vmatprep.subr.bf16.mxu0 %v217
    %251 = vmatpush1.bf16.msra.mxu0 %v216
    %252 = vmatprep.subr.bf16.mxu0 %v215
    %253 = vmatpush1.bf16.msra.mxu0 %v214
    %254 = vmatprep.subr.bf16.mxu0 %v213
    %255 = vmatpush1.bf16.msra.mxu0 %v212
    %256 = vmatprep.subr.bf16.mxu0 %v211
    %257 = vmatpush1.bf16.msra.mxu0 %v210
    %258 = vmatprep.subr.bf16.mxu0 0
    %259 = vmatpush2.bf16.msra.mxu0 0
    %260 = vmatprep.subr.bf16.mxu0 0
    %261 = vmatpush2.bf16.msra.mxu0 0
    %262 = vmatprep.subr.bf16.mxu0 0
    %263 = vmatpush2.bf16.msra.mxu0 0
    %264 = vmatprep.subr.bf16.mxu0 0
    %265 = vmatpush2.bf16.msra.mxu0 0
    %266 = vmatprep.subr.bf16.mxu0 0
    %267 = vmatpush2.bf16.msra.mxu0 0
    %268 = vmatprep.subr.bf16.mxu0 0
    %269 = vmatpush2.bf16.msra.mxu0 0
    %270 = vmatprep.subr.bf16.mxu0 0
    %271 = vmatpush2.bf16.msra.mxu0 0
    %272 = vmatprep.subr.bf16.mxu0 0
    %273 = vmatpush2.bf16.msra.mxu0 0
    %274 = vmatprep.mubr.bf16.mxu0 0
    %275 = vmatmul.mubr.bf16.gmra.mxu0 %v146
    %v276 = vpop.f32.mrf.mxu0
    %v277 = vadd.f32 %v107, %v276
    %v278 = vpop.f32.mrf.mxu0
    %v279 = vadd.f32 %v111, %v278
    %v280 = vpop.f32.mrf.mxu0
    %v281 = vadd.f32 %v107, %v280
    %v282 = vpop.f32.mrf.mxu0
    %v283 = vadd.f32 %v111, %v282
    %284 = vmatprep.mubr.bf16.mxu0 0
    %285 = vmatmul.mubr.bf16.gmra.mxu0 %v147
    %v286 = vpop.f32.mrf.mxu0
    %v287 = vadd.f32 %v107, %v286
    %v288 = vpop.f32.mrf.mxu0
    %v289 = vadd.f32 %v111, %v288
    %v290 = vpop.f32.mrf.mxu0
    %v291 = vadd.f32 %v107, %v290
    %v292 = vpop.f32.mrf.mxu0
    %v293 = vadd.f32 %v111, %v292
    %294 = vmatprep.mubr.bf16.mxu0 0
    %295 = vmatmul.mubr.bf16.gmra.mxu0 %v148
    %v296 = vpop.f32.mrf.mxu0
    %v297 = vadd.f32 %v107, %v296
    %v298 = vpop.f32.mrf.mxu0
    %v299 = vadd.f32 %v111, %v298
    %v300 = vpop.f32.mrf.mxu0
    %v301 = vadd.f32 %v107, %v300
    %v302 = vpop.f32.mrf.mxu0
    %v303 = vadd.f32 %v111, %v302
    %304 = vmatprep.mubr.bf16.mxu0 0
    %305 = vmatmul.mubr.bf16.gmra.mxu0 %v149
    %v306 = vpop.f32.mrf.mxu0
    %v307 = vadd.f32 %v107, %v306
    %v308 = vpop.f32.mrf.mxu0
    %v309 = vadd.f32 %v111, %v308
    %v310 = vpop.f32.mrf.mxu0
    %v311 = vadd.f32 %v107, %v310
    %v312 = vpop.f32.mrf.mxu0
    %v313 = vadd.f32 %v111, %v312
    %314 = vmatprep.mubr.bf16.mxu0 0
    %315 = vmatmul.mubr.bf16.gmra.mxu0 %v150
    %v316 = vpop.f32.mrf.mxu0
    %v317 = vadd.f32 %v107, %v316
    %v318 = vpop.f32.mrf.mxu0
    %v319 = vadd.f32 %v111, %v318
    %v320 = vpop.f32.mrf.mxu0
    %v321 = vadd.f32 %v107, %v320
    %v322 = vpop.f32.mrf.mxu0
    %v323 = vadd.f32 %v111, %v322
    %324 = vmatprep.mubr.bf16.mxu0 0
    %325 = vmatmul.mubr.bf16.gmra.mxu0 %v151
    %v326 = vpop.f32.mrf.mxu0
    %v327 = vadd.f32 %v107, %v326
    %v328 = vpop.f32.mrf.mxu0
    %v329 = vadd.f32 %v111, %v328
    %v330 = vpop.f32.mrf.mxu0
    %v331 = vadd.f32 %v107, %v330
    %v332 = vpop.f32.mrf.mxu0
    %v333 = vadd.f32 %v111, %v332
    %334 = vmatprep.mubr.bf16.mxu0 0
    %335 = vmatmul.mubr.bf16.gmra.mxu0 %v152
    %v336 = vpop.f32.mrf.mxu0
    %v337 = vadd.f32 %v107, %v336
    %v338 = vpop.f32.mrf.mxu0
    %v339 = vadd.f32 %v111, %v338
    %v340 = vpop.f32.mrf.mxu0
    %v341 = vadd.f32 %v107, %v340
    %v342 = vpop.f32.mrf.mxu0
    %v343 = vadd.f32 %v111, %v342
    %344 = vmatprep.mubr.bf16.mxu0 0
    %345 = vmatmul.mubr.bf16.gmra.mxu0 %v153
    %v346 = vpop.f32.mrf.mxu0
    %v347 = vadd.f32 %v107, %v346
    %v348 = vpop.f32.mrf.mxu0
    %v349 = vadd.f32 %v111, %v348
    %v350 = vpop.f32.mrf.mxu0
    %v351 = vadd.f32 %v107, %v350
    %v352 = vpop.f32.mrf.mxu0
    %v353 = vadd.f32 %v111, %v352
    %354 = vdwg.mxu0
    %v355 = vmax.f32 %v277, 0.0
    %v356 = vmax.f32 %v279, 0.0
    %v357 = vmax.f32 %v281, 0.0
    %v358 = vmax.f32 %v283, 0.0
    %v359 = vmax.f32 %v287, 0.0
    %v360 = vmax.f32 %v289, 0.0
    %v361 = vmax.f32 %v291, 0.0
    %v362 = vmax.f32 %v293, 0.0
    %v363 = vmax.f32 %v297, 0.0
    %v364 = vmax.f32 %v299, 0.0
    %v365 = vmax.f32 %v301, 0.0
    %v366 = vmax.f32 %v303, 0.0
    %v367 = vmax.f32 %v307, 0.0
    %v368 = vmax.f32 %v309, 0.0
    %v369 = vmax.f32 %v311, 0.0
    %v370 = vmax.f32 %v313, 0.0
    %v371 = vmax.f32 %v317, 0.0
    %v372 = vmax.f32 %v319, 0.0
    %v373 = vmax.f32 %v321, 0.0
    %v374 = vmax.f32 %v323, 0.0
    %v375 = vmax.f32 %v327, 0.0
    %v376 = vmax.f32 %v329, 0.0
    %v377 = vmax.f32 %v331, 0.0
    %v378 = vmax.f32 %v333, 0.0
    %v379 = vmax.f32 %v337, 0.0
    %v380 = vmax.f32 %v339, 0.0
    %v381 = vmax.f32 %v341, 0.0
    %v382 = vmax.f32 %v343, 0.0
    %v383 = vmax.f32 %v347, 0.0
    %v384 = vmax.f32 %v349, 0.0
    %v385 = vmax.f32 %v351, 0.0
    %v386 = vmax.f32 %v353, 0.0
    %v387 = vpack.c.bf16 %v357, %v355
    %v388 = vpack.c.bf16 %v358, %v356
    %v389 = vpack.c.bf16 %v361, %v359
    %v390 = vpack.c.bf16 %v362, %v360
    %v391 = vpack.c.bf16 %v365, %v363
    %v392 = vpack.c.bf16 %v366, %v364
    %v393 = vpack.c.bf16 %v369, %v367
    %v394 = vpack.c.bf16 %v370, %v368
    %v395 = vpack.c.bf16 %v373, %v371
    %v396 = vpack.c.bf16 %v374, %v372
    %v397 = vpack.c.bf16 %v377, %v375
    %v398 = vpack.c.bf16 %v378, %v376
    %v399 = vpack.c.bf16 %v381, %v379
    %v400 = vpack.c.bf16 %v382, %v380
    %v401 = vpack.c.bf16 %v385, %v383
    %v402 = vpack.c.bf16 %v386, %v384
    %v403 = vld [vmem:[#allocation8] sm:$0xff]
    %v404 = vld [vmem:[#allocation8 + $0x8] sm:$0xff]
    %v405 = vld [vmem:[#allocation8 + $0x10] sm:$0xff]
    %v406 = vld [vmem:[#allocation8 + $0x18] sm:$0xff]
    %v407 = vld [vmem:[#allocation8 + $0x20] sm:$0xff]
    %v408 = vld [vmem:[#allocation8 + $0x28] sm:$0xff]
    %v409 = vld [vmem:[#allocation8 + $0x30] sm:$0xff]
    %v410 = vld [vmem:[#allocation8 + $0x38] sm:$0xff]
    %v411 = vld [vmem:[#allocation8 + $0x40] sm:$0xff]
    %v412 = vld [vmem:[#allocation8 + $0x48] sm:$0xff]
    %v413 = vld [vmem:[#allocation8 + $0x50] sm:$0xff]
    %v414 = vld [vmem:[#allocation8 + $0x58] sm:$0xff]
    %v415 = vld [vmem:[#allocation8 + $0x60] sm:$0xff]
    %v416 = vld [vmem:[#allocation8 + $0x68] sm:$0xff]
    %v417 = vld [vmem:[#allocation8 + $0x70] sm:$0xff]
    %v418 = vld [vmem:[#allocation8 + $0x78] sm:$0xff]
    %v419 = vld [vmem:[#allocation8 + $0x80] sm:$0xff]
    %v420 = vld [vmem:[#allocation8 + $0x88] sm:$0xff]
    %v421 = vld [vmem:[#allocation8 + $0x90] sm:$0xff]
    %v422 = vld [vmem:[#allocation8 + $0x98] sm:$0xff]
    %v423 = vld [vmem:[#allocation8 + $0xa0] sm:$0xff]
    %v424 = vld [vmem:[#allocation8 + $0xa8] sm:$0xff]
    %v425 = vld [vmem:[#allocation8 + $0xb0] sm:$0xff]
    %v426 = vld [vmem:[#allocation8 + $0xb8] sm:$0xff]
    %v427 = vld [vmem:[#allocation8 + $0xc0] sm:$0xff]
    %v428 = vld [vmem:[#allocation8 + $0xc8] sm:$0xff]
    %v429 = vld [vmem:[#allocation8 + $0xd0] sm:$0xff]
    %v430 = vld [vmem:[#allocation8 + $0xd8] sm:$0xff]
    %v431 = vld [vmem:[#allocation8 + $0xe0] sm:$0xff]
    %v432 = vld [vmem:[#allocation8 + $0xe8] sm:$0xff]
    %v433 = vld [vmem:[#allocation8 + $0xf0] sm:$0xff]
    %v434 = vld [vmem:[#allocation8 + $0xf8] sm:$0xff]
    %v435 = vld [vmem:[%s4] sm:$0x3]
    %v437 = vlaneseq
    %v438 = vshrl.u32 %v437, 7
    %v439 = vsub.s32 0, %v438
    %v440 = vrot.slane %v435, %v439
    %v441 = vlaneseq
    %v442 = vshrl.u32 %v441, 7
    %v443 = vsub.s32 1, %v442
    %v444 = vrot.slane %v435, %v443
    %v479 = vunpack.c.l.b16 %v403
    %v480 = vunpack.c.h.b16 %v403
    %v481 = vunpack.c.l.b16 %v404
    %v482 = vunpack.c.h.b16 %v404
    %v483 = vunpack.c.l.b16 %v405
    %v484 = vunpack.c.h.b16 %v405
    %v485 = vunpack.c.l.b16 %v406
    %v486 = vunpack.c.h.b16 %v406
    %v487 = vunpack.c.l.b16 %v407
    %v488 = vunpack.c.h.b16 %v407
    %v489 = vunpack.c.l.b16 %v408
    %v490 = vunpack.c.h.b16 %v408
    %v491 = vunpack.c.l.b16 %v409
    %v492 = vunpack.c.h.b16 %v409
    %v493 = vunpack.c.l.b16 %v410
    %v494 = vunpack.c.h.b16 %v410
    %v495 = vunpack.c.l.b16 %v411
    %v496 = vunpack.c.h.b16 %v411
    %v497 = vunpack.c.l.b16 %v412
    %v498 = vunpack.c.h.b16 %v412
    %v499 = vunpack.c.l.b16 %v413
    %v500 = vunpack.c.h.b16 %v413
    %v501 = vunpack.c.l.b16 %v414
    %v502 = vunpack.c.h.b16 %v414
    %v503 = vunpack.c.l.b16 %v415
    %v504 = vunpack.c.h.b16 %v415
    %v505 = vunpack.c.l.b16 %v416
    %v506 = vunpack.c.h.b16 %v416
    %v507 = vunpack.c.l.b16 %v417
    %v508 = vunpack.c.h.b16 %v417
    %v509 = vunpack.c.l.b16 %v418
    %v510 = vunpack.c.h.b16 %v418
    %v511 = vunpack.c.l.b16 %v419
    %v512 = vunpack.c.h.b16 %v419
    %v513 = vunpack.c.l.b16 %v420
    %v514 = vunpack.c.h.b16 %v420
    %v515 = vunpack.c.l.b16 %v421
    %v516 = vunpack.c.h.b16 %v421
    %v517 = vunpack.c.l.b16 %v422
    %v518 = vunpack.c.h.b16 %v422
    %v519 = vunpack.c.l.b16 %v423
    %v520 = vunpack.c.h.b16 %v423
    %v521 = vunpack.c.l.b16 %v424
    %v522 = vunpack.c.h.b16 %v424
    %v523 = vunpack.c.l.b16 %v425
    %v524 = vunpack.c.h.b16 %v425
    %v525 = vunpack.c.l.b16 %v426
    %v526 = vunpack.c.h.b16 %v426
    %v527 = vunpack.c.l.b16 %v427
    %v528 = vunpack.c.h.b16 %v427
    %v529 = vunpack.c.l.b16 %v428
    %v530 = vunpack.c.h.b16 %v428
    %v531 = vunpack.c.l.b16 %v429
    %v532 = vunpack.c.h.b16 %v429
    %v533 = vunpack.c.l.b16 %v430
    %v534 = vunpack.c.h.b16 %v430
    %v535 = vunpack.c.l.b16 %v431
    %v536 = vunpack.c.h.b16 %v431
    %v537 = vunpack.c.l.b16 %v432
    %v538 = vunpack.c.h.b16 %v432
    %v539 = vunpack.c.l.b16 %v433
    %v540 = vunpack.c.h.b16 %v433
    %v541 = vunpack.c.l.b16 %v434
    %v542 = vunpack.c.h.b16 %v434
    %v543 = vpack.c.b16 %v481, %v479
    %v544 = vpack.c.b16 %v482, %v480
    %v545 = vpack.c.b16 %v485, %v483
    %v546 = vpack.c.b16 %v486, %v484
    %v547 = vpack.c.b16 %v489, %v487
    %v548 = vpack.c.b16 %v490, %v488
    %v549 = vpack.c.b16 %v493, %v491
    %v550 = vpack.c.b16 %v494, %v492
    %v551 = vpack.c.b16 %v497, %v495
    %v552 = vpack.c.b16 %v498, %v496
    %v553 = vpack.c.b16 %v501, %v499
    %v554 = vpack.c.b16 %v502, %v500
    %v555 = vpack.c.b16 %v505, %v503
    %v556 = vpack.c.b16 %v506, %v504
    %v557 = vpack.c.b16 %v509, %v507
    %v558 = vpack.c.b16 %v510, %v508
    %v559 = vpack.c.b16 %v513, %v511
    %v560 = vpack.c.b16 %v514, %v512
    %v561 = vpack.c.b16 %v517, %v515
    %v562 = vpack.c.b16 %v518, %v516
    %v563 = vpack.c.b16 %v521, %v519
    %v564 = vpack.c.b16 %v522, %v520
    %v565 = vpack.c.b16 %v525, %v523
    %v566 = vpack.c.b16 %v526, %v524
    %v567 = vpack.c.b16 %v529, %v527
    %v568 = vpack.c.b16 %v530, %v528
    %v569 = vpack.c.b16 %v533, %v531
    %v570 = vpack.c.b16 %v534, %v532
    %v571 = vpack.c.b16 %v537, %v535
    %v572 = vpack.c.b16 %v538, %v536
    %v573 = vpack.c.b16 %v541, %v539
    %v574 = vpack.c.b16 %v542, %v540
    %607 = vmatprep.subr.bf16.mxu0 %v558
    %608 = vmatpush1.bf16.msra.mxu0 %v557
    %609 = vmatprep.subr.bf16.mxu0 %v556
    %610 = vmatpush1.bf16.msra.mxu0 %v555
    %611 = vmatprep.subr.bf16.mxu0 %v554
    %612 = vmatpush1.bf16.msra.mxu0 %v553
    %613 = vmatprep.subr.bf16.mxu0 %v552
    %614 = vmatpush1.bf16.msra.mxu0 %v551
    %615 = vmatprep.subr.bf16.mxu0 %v550
    %616 = vmatpush1.bf16.msra.mxu0 %v549
    %617 = vmatprep.subr.bf16.mxu0 %v548
    %618 = vmatpush1.bf16.msra.mxu0 %v547
    %619 = vmatprep.subr.bf16.mxu0 %v546
    %620 = vmatpush1.bf16.msra.mxu0 %v545
    %621 = vmatprep.subr.bf16.mxu0 %v544
    %622 = vmatpush1.bf16.msra.mxu0 %v543
    %623 = vmatprep.subr.bf16.mxu0 %v574
    %624 = vmatpush2.bf16.msra.mxu0 %v573
    %625 = vmatprep.subr.bf16.mxu0 %v572
    %626 = vmatpush2.bf16.msra.mxu0 %v571
    %627 = vmatprep.subr.bf16.mxu0 %v570
    %628 = vmatpush2.bf16.msra.mxu0 %v569
    %629 = vmatprep.subr.bf16.mxu0 %v568
    %630 = vmatpush2.bf16.msra.mxu0 %v567
    %631 = vmatprep.subr.bf16.mxu0 %v566
    %632 = vmatpush2.bf16.msra.mxu0 %v565
    %633 = vmatprep.subr.bf16.mxu0 %v564
    %634 = vmatpush2.bf16.msra.mxu0 %v563
    %635 = vmatprep.subr.bf16.mxu0 %v562
    %636 = vmatpush2.bf16.msra.mxu0 %v561
    %637 = vmatprep.subr.bf16.mxu0 %v560
    %638 = vmatpush2.bf16.msra.mxu0 %v559
    %639 = vmatprep.mubr.bf16.mxu0 %v388
    %640 = vmatmul.mubr.bf16.gmra.mxu0 %v387
    %v641 = vpop.f32.mrf.mxu0
    %v642 = vadd.f32 %v440, %v641
    %v643 = vpop.f32.mrf.mxu0
    %v644 = vadd.f32 %v444, %v643
    %v645 = vpop.f32.mrf.mxu0
    %v646 = vadd.f32 %v440, %v645
    %v647 = vpop.f32.mrf.mxu0
    %v648 = vadd.f32 %v444, %v647
    %649 = vmatprep.mubr.bf16.mxu0 %v390
    %650 = vmatmul.mubr.bf16.gmra.mxu0 %v389
    %v651 = vpop.f32.mrf.mxu0
    %v652 = vadd.f32 %v440, %v651
    %v653 = vpop.f32.mrf.mxu0
    %v654 = vadd.f32 %v444, %v653
    %v655 = vpop.f32.mrf.mxu0
    %v656 = vadd.f32 %v440, %v655
    %v657 = vpop.f32.mrf.mxu0
    %v658 = vadd.f32 %v444, %v657
    %659 = vmatprep.mubr.bf16.mxu0 %v392
    %660 = vmatmul.mubr.bf16.gmra.mxu0 %v391
    %v661 = vpop.f32.mrf.mxu0
    %v662 = vadd.f32 %v440, %v661
    %v663 = vpop.f32.mrf.mxu0
    %v664 = vadd.f32 %v444, %v663
    %v665 = vpop.f32.mrf.mxu0
    %v666 = vadd.f32 %v440, %v665
    %v667 = vpop.f32.mrf.mxu0
    %v668 = vadd.f32 %v444, %v667
    %669 = vmatprep.mubr.bf16.mxu0 %v394
    %670 = vmatmul.mubr.bf16.gmra.mxu0 %v393
    %v671 = vpop.f32.mrf.mxu0
    %v672 = vadd.f32 %v440, %v671
    %v673 = vpop.f32.mrf.mxu0
    %v674 = vadd.f32 %v444, %v673
    %v675 = vpop.f32.mrf.mxu0
    %v676 = vadd.f32 %v440, %v675
    %v677 = vpop.f32.mrf.mxu0
    %v678 = vadd.f32 %v444, %v677
    %679 = vmatprep.mubr.bf16.mxu0 %v396
    %680 = vmatmul.mubr.bf16.gmra.mxu0 %v395
    %v681 = vpop.f32.mrf.mxu0
    %v682 = vadd.f32 %v440, %v681
    %v683 = vpop.f32.mrf.mxu0
    %v684 = vadd.f32 %v444, %v683
    %v685 = vpop.f32.mrf.mxu0
    %v686 = vadd.f32 %v440, %v685
    %v687 = vpop.f32.mrf.mxu0
    %v688 = vadd.f32 %v444, %v687
    %689 = vmatprep.mubr.bf16.mxu0 %v398
    %690 = vmatmul.mubr.bf16.gmra.mxu0 %v397
    %v691 = vpop.f32.mrf.mxu0
    %v692 = vadd.f32 %v440, %v691
    %v693 = vpop.f32.mrf.mxu0
    %v694 = vadd.f32 %v444, %v693
    %v695 = vpop.f32.mrf.mxu0
    %v696 = vadd.f32 %v440, %v695
    %v697 = vpop.f32.mrf.mxu0
    %v698 = vadd.f32 %v444, %v697
    %699 = vmatprep.mubr.bf16.mxu0 %v400
    %700 = vmatmul.mubr.bf16.gmra.mxu0 %v399
    %v701 = vpop.f32.mrf.mxu0
    %v702 = vadd.f32 %v440, %v701
    %v703 = vpop.f32.mrf.mxu0
    %v704 = vadd.f32 %v444, %v703
    %v705 = vpop.f32.mrf.mxu0
    %v706 = vadd.f32 %v440, %v705
    %v707 = vpop.f32.mrf.mxu0
    %v708 = vadd.f32 %v444, %v707
    %709 = vmatprep.mubr.bf16.mxu0 %v402
    %710 = vmatmul.mubr.bf16.gmra.mxu0 %v401
    %v711 = vpop.f32.mrf.mxu0
    %v712 = vadd.f32 %v440, %v711
    %v713 = vpop.f32.mrf.mxu0
    %v714 = vadd.f32 %v444, %v713
    %v715 = vpop.f32.mrf.mxu0
    %v716 = vadd.f32 %v440, %v715
    %v717 = vpop.f32.mrf.mxu0
    %v718 = vadd.f32 %v444, %v717
    %719 = vdwg.mxu0
    %v720 = vmax.f32 %v642, 0.0
    %v721 = vmax.f32 %v644, 0.0
    %v722 = vmax.f32 %v646, 0.0
    %v723 = vmax.f32 %v648, 0.0
    %v724 = vmax.f32 %v652, 0.0
    %v725 = vmax.f32 %v654, 0.0
    %v726 = vmax.f32 %v656, 0.0
    %v727 = vmax.f32 %v658, 0.0
    %v728 = vmax.f32 %v662, 0.0
    %v729 = vmax.f32 %v664, 0.0
    %v730 = vmax.f32 %v666, 0.0
    %v731 = vmax.f32 %v668, 0.0
    %v732 = vmax.f32 %v672, 0.0
    %v733 = vmax.f32 %v674, 0.0
    %v734 = vmax.f32 %v676, 0.0
    %v735 = vmax.f32 %v678, 0.0
    %v736 = vmax.f32 %v682, 0.0
    %v737 = vmax.f32 %v684, 0.0
    %v738 = vmax.f32 %v686, 0.0
    %v739 = vmax.f32 %v688, 0.0
    %v740 = vmax.f32 %v692, 0.0
    %v741 = vmax.f32 %v694, 0.0
    %v742 = vmax.f32 %v696, 0.0
    %v743 = vmax.f32 %v698, 0.0
    %v744 = vmax.f32 %v702, 0.0
    %v745 = vmax.f32 %v704, 0.0
    %v746 = vmax.f32 %v706, 0.0
    %v747 = vmax.f32 %v708, 0.0
    %v748 = vmax.f32 %v712, 0.0
    %v749 = vmax.f32 %v714, 0.0
    %v750 = vmax.f32 %v716, 0.0
    %v751 = vmax.f32 %v718, 0.0
    %v752 = vpack.c.bf16 %v722, %v720
    %v753 = vpack.c.bf16 %v723, %v721
    %v754 = vpack.c.bf16 %v726, %v724
    %v755 = vpack.c.bf16 %v727, %v725
    %v756 = vpack.c.bf16 %v730, %v728
    %v757 = vpack.c.bf16 %v731, %v729
    %v758 = vpack.c.bf16 %v734, %v732
    %v759 = vpack.c.bf16 %v735, %v733
    %v760 = vpack.c.bf16 %v738, %v736
    %v761 = vpack.c.bf16 %v739, %v737
    %v762 = vpack.c.bf16 %v742, %v740
    %v763 = vpack.c.bf16 %v743, %v741
    %v764 = vpack.c.bf16 %v746, %v744
    %v765 = vpack.c.bf16 %v747, %v745
    %v766 = vpack.c.bf16 %v750, %v748
    %v767 = vpack.c.bf16 %v751, %v749
    %v768 = vld [vmem:[%s5] sm:$0x3]
    %s769 = sld [smem:[#allocation2]]
    %v770 = vstv %s769
    %v773 = vunpack.c.l.s4 1966171168
    %v774 = vunpack.c.0.s8 %v773
    %v775 = vlaneseq
    %v776 = vshrl.u32 %v775, 7
    %v777 = vsub.s32 %v774, %v776
    %v778 = vrot.slane %v768, %v777
    %v779 = vcombine.high %v778, %v778
    %v781 = vunpack.c.l.s4 1966171168
    %v782 = vunpack.c.0.s8 %v781
    %v783 = vlaneseq
    %v784 = vshrl.u32 %v783, 7
    %v785 = vsub.s32 %v782, %v784
    %v786 = vrot.slane %v778, %v785
    %v788 = vunpack.c.l.s4 1966171168
    %v789 = vunpack.c.0.s8 %v788
    %v790 = vlaneseq
    %v791 = vshrl.u32 %v790, 7
    %v792 = vsub.s32 %v789, %v791
    %v793 = vrot.slane %v779, %v792
    %796 = vmatprep.subr.bf16.mxu0 %v767
    %797 = vmatpush1.bf16.xpose.msra.mxu0 %v766
    %798 = vmatprep.subr.bf16.mxu0 %v765
    %799 = vmatpush1.bf16.xpose.msra.mxu0 %v764
    %800 = vmatprep.subr.bf16.mxu0 %v763
    %801 = vmatpush1.bf16.xpose.msra.mxu0 %v762
    %802 = vmatprep.subr.bf16.mxu0 %v761
    %803 = vmatpush1.bf16.xpose.msra.mxu0 %v760
    %804 = vmatprep.subr.bf16.mxu0 %v759
    %805 = vmatpush1.bf16.xpose.msra.mxu0 %v758
    %806 = vmatprep.subr.bf16.mxu0 %v757
    %807 = vmatpush1.bf16.xpose.msra.mxu0 %v756
    %808 = vmatprep.subr.bf16.mxu0 %v755
    %809 = vmatpush1.bf16.xpose.msra.mxu0 %v754
    %810 = vmatprep.subr.bf16.mxu0 %v753
    %811 = vmatpush1.bf16.xpose.msra.mxu0 %v752
    %812 = vmatprep.subr.bf16.mxu0 0
    %813 = vmatpush2.bf16.xpose.msra.mxu0 0
    %814 = vmatprep.subr.bf16.mxu0 0
    %815 = vmatpush2.bf16.xpose.msra.mxu0 0
    %816 = vmatprep.subr.bf16.mxu0 0
    %817 = vmatpush2.bf16.xpose.msra.mxu0 0
    %818 = vmatprep.subr.bf16.mxu0 0
    %819 = vmatpush2.bf16.xpose.msra.mxu0 0
    %820 = vmatprep.subr.bf16.mxu0 0
    %821 = vmatpush2.bf16.xpose.msra.mxu0 0
    %822 = vmatprep.subr.bf16.mxu0 0
    %823 = vmatpush2.bf16.xpose.msra.mxu0 0
    %824 = vmatprep.subr.bf16.mxu0 0
    %825 = vmatpush2.bf16.xpose.msra.mxu0 0
    %826 = vmatprep.subr.bf16.mxu0 0
    %827 = vmatpush2.bf16.xpose.msra.mxu0 0
    %828 = vmatprep.mubr.bf16.mxu0 %v793
    %829 = vmatmul.mubr.bf16.gmra.mxu0 %v786
    %v830 = vpop.f32.mrf.mxu0
    %v831 = vadd.f32 %v770, %v830
    %v832 = vpop.f32.mrf.mxu0
    %v833 = vpop.f32.mrf.mxu0
    %v834 = vpop.f32.mrf.mxu0
    %835 = vdwg.mxu0
    %836 = vst [vmem:[#allocation9] sm:$0x1] %v831
    // Predicated region
    $region42: #{tpu_custom_call.1} parent=1 // pred_check
      _
    $region43: #{tpu_custom_call.1} parent=1 // pred_check_branch
      %838 = sbr.rel (0) target = $region45
    $region44: #{tpu_custom_call.1} parent=1 // pred_region
      %s840 = ssub.s32 16, 16
      %841 = vsyncadd [#allocation5], %s840
      %s843 = sshll.u32 [#allocation9], 4
      %s844 = int_to_ptr.vmem [resolvable:$true] %s843
      %846 = dma.vmem_to_hbm [thread:$0]  %s844, 16, %s7, [#allocation5]
    $region45: #{tpu_custom_call.1} parent=1 // pred_fallthru
      _
    // Predicated region
    $region46: #{tpu_custom_call.1} parent=1 // pred_check
      _
    $region47: #{tpu_custom_call.1} parent=1 // pred_check_branch
      %848 = sbr.rel (0) target = $region49
    $region48: #{tpu_custom_call.1} parent=1 // pred_region
      %849 = dma.done [#allocation5], 16
    $region49: #{tpu_custom_call.1} parent=1 // pred_fallthru
      _
    %850 = vsyncpa [#allocation4], 1
    %851 = vsyncpa [#allocation7], 1
    %852 = vsyncpa [#allocation5], 1

</llo_original>
